<compile_context>
chip_gen: v7x
topology: tpu7x:2x2x1
jax: 0.10.0
libtpu: 0.0.40
codegen_flags: <defaults>
</compile_context>

<pallas_src>
import jax
import jax.numpy as jnp
from jax.experimental import pallas as pl
from jax.experimental.pallas import tpu as pltpu


LANE = 128
SUBLANE = 8
TILE = 1024                          # tm = tk for large graphs (2 MiB bf16 tile)
XW_RESIDENT_BYTES = 8 * 1024 * 1024  # keep XW fully in VMEM below this size


def _round_up(v, m):
    return ((v + m - 1) // m) * m


# ----------------------------- Pallas kernel -------------------------------

def _make_agg_kernel(tk, xw_resident):
    """o[i, :] = sum_k adj[i, k] @ xw[k, :]   (bf16 MXU, f32 accumulation).

    The f32 output block is resident across the k (reduction) axis and is
    used directly as the accumulator: k == 0 writes, later steps add
    (no zero-init store, no VMEM scratch, no finalize matmul).
    """
    def kernel(adj_ref, xw_ref, o_ref):
        k = pl.program_id(1)
        if xw_resident:
            # XW lives fully in VMEM; slice the k-th row block.
            start = pl.multiple_of(k * tk, tk)
            xw_tile = xw_ref[pl.ds(start, tk), :]
        else:
            xw_tile = xw_ref[...]

        contrib = jnp.dot(adj_ref[...], xw_tile,
                          preferred_element_type=jnp.float32)

        @pl.when(k == 0)
        def _write():
            o_ref[...] = contrib

        @pl.when(k != 0)
        def _accumulate():
            o_ref[...] += contrib

    return kernel


def _aggregate(adj_p, xw_p, tm, tk):
    """pallas_call wrapper for the (n_p, n_p) x (n_p, cout_p) aggregation."""
    n_p = adj_p.shape[0]
    cout_p = xw_p.shape[1]
    grid = (n_p // tm, n_p // tk)

    xw_bytes = xw_p.size * 2  # bf16
    xw_resident = xw_bytes <= XW_RESIDENT_BYTES
    if xw_resident:
        # Constant block index -> single DMA for the whole XW, kept in VMEM.
        xw_spec = pl.BlockSpec((n_p, cout_p), lambda i, k: (0, 0))
        xw_block_bytes = xw_bytes
        xw_hbm_reads = 1
    else:
        xw_spec = pl.BlockSpec((tk, cout_p), lambda i, k: (k, 0))
        xw_block_bytes = tk * cout_p * 2
        xw_hbm_reads = grid[0]

    # Double-buffered working set estimate; stays v7x-safe (<= default scoped
    # 32 MiB) with TILE = 1024.  (On v5e/v6e TILE could be raised to 2048 with
    # a larger vmem_limit_bytes.)
    vmem_need = (2 * tm * tk * 2          # adjacency tiles (bf16)
                 + 2 * tm * cout_p * 4    # output/accumulator block (f32)
                 + 2 * xw_block_bytes)    # XW block(s) (bf16)
    vmem_limit = max(32 * 1024 * 1024, int(vmem_need * 1.5))

    cost = pl.CostEstimate(
        flops=2 * n_p * n_p * cout_p,
        transcendentals=0,
        bytes_accessed=(n_p * n_p * 2
                        + xw_hbm_reads * n_p * cout_p * 2
                        + n_p * cout_p * 4),
    )

    return pl.pallas_call(
        _make_agg_kernel(tk, xw_resident),
        out_shape=jax.ShapeDtypeStruct((n_p, cout_p), jnp.float32),
        grid_spec=pltpu.PrefetchScalarGridSpec(
            num_scalar_prefetch=0,
            grid=grid,
            in_specs=[
                pl.BlockSpec((tm, tk), lambda i, k: (i, k)),  # adjacency tile
                xw_spec,                                      # XW (resident/tiled)
            ],
            out_specs=pl.BlockSpec((tm, cout_p), lambda i, k: (i, 0)),
        ),
        compiler_params=pltpu.CompilerParams(
            dimension_semantics=("parallel", "arbitrary"),
            vmem_limit_bytes=vmem_limit,
        ),
        cost_estimate=cost,
    )(adj_p, xw_p)


# ------------------------------ graph glue ---------------------------------

def _build_graph_operands(edge_index, edge_weight, num_nodes, n_pad):
    """Un-normalized (A + I) scattered directly into the padded bf16 buffer,
    plus D^{-1/2}.  Normalization is folded into XW rows (column side) and the
    output rows (row side), so the N^2 buffer is written exactly once, in bf16.
    """
    src = edge_index[0]
    dst = edge_index[1]
    if edge_weight is None:
        edge_weight = jnp.ones(src.shape[0], dtype=jnp.float32)
    loops = jnp.arange(num_nodes, dtype=src.dtype)
    src_all = jnp.concatenate([src, loops])
    dst_all = jnp.concatenate([dst, loops])
    w_all = jnp.concatenate(
        [edge_weight.astype(jnp.float32),
         jnp.ones(num_nodes, dtype=jnp.float32)])

    # Degree over targets (PyG gcn_norm, flow="source_to_target"), O(E).
    deg = jnp.zeros((num_nodes,), jnp.float32).at[dst_all].add(w_all)
    dinv = jnp.where(deg > 0.0, jax.lax.rsqrt(deg), 0.0)

    # adj[t, s] = weight of edge s -> t, plus self loops; padded, bf16.
    # TODO(synk): for very large graphs a sparse SpMM Pallas path would avoid
    # materializing the dense N^2 adjacency at all.
    adj_p = jnp.zeros((n_pad, n_pad), jnp.bfloat16).at[dst_all, src_all].add(
        w_all.astype(jnp.bfloat16))
    return adj_p, dinv


def variational_linear_encoder_forward(params, x, edge_index, edge_weight=None):
    """Forward pass of VariationalLinearEncoder: returns (mu, logstd)."""
    (w_mu, b_mu), (w_ls, b_ls) = params
    n, cin = x.shape
    cout = w_mu.shape[1]
    cout_p = _round_up(2 * cout, LANE)        # lane-dense combined channels

    # Tile geometry: large graphs use TILE x TILE adjacency tiles (>= 2 row
    # tiles -> both v7x TensorCores get work); small graphs use one lane-dense
    # tile covering the whole (padded) graph.
    if n <= TILE:
        n_p = _round_up(n, LANE)
        tm = tk = n_p
    else:
        n_p = _round_up(n, TILE)
        tm = tk = TILE

    adj_p, dinv = _build_graph_operands(edge_index, edge_weight, n, n_p)

    # Precompute XW for BOTH heads (tiny f32 matmul), fold column-side D^{-1/2}
    # into its rows, pad lane-dense, cast to bf16 for the MXU.
    w = jnp.concatenate([w_mu, w_ls], axis=1)             # (cin, 2*cout)
    xw = (x.astype(jnp.float32) @ w) * dinv[:, None]      # (n, 2*cout) f32
    xw_p = jnp.zeros((n_p, cout_p), jnp.bfloat16).at[:n, :2 * cout].set(
        xw.astype(jnp.bfloat16))

    agg = _aggregate(adj_p, xw_p, tm, tk)                 # (n_p, cout_p) f32

    # Row-side D^{-1/2} and biases on the un-padded slice (f32 epilogue).
    out = agg[:n, :2 * cout] * dinv[:, None]
    mu = out[:, :cout] + b_mu[None, :]
    logstd = out[:, cout:] + b_ls[None, :]
    return mu, logstd


def glorot(key, shape):
    fan_in, fan_out = shape
    limit = jnp.sqrt(6.0 / (fan_in + fan_out))
    return jax.random.uniform(key, shape, jnp.float32, -limit, limit)


# ------------------------------- main ---------------------------------------

if __name__ == "__main__":
    key = jax.random.PRNGKey(0)

    num_nodes = 64
    in_channels = 32
    out_channels = 16

    # Deterministic node features
    key, k_x = jax.random.split(key)
    x = jax.random.normal(k_x, (num_nodes, in_channels), jnp.float32)

    # Deterministic graph: undirected ring (both directions of each edge)
    ring_src = jnp.arange(num_nodes, dtype=jnp.int32)
    ring_dst = (ring_src + 1) % num_nodes
    src = jnp.concatenate([ring_src, ring_dst])
    dst = jnp.concatenate([ring_dst, ring_src])
    edge_index = jnp.stack([src, dst], axis=0)  # (2, E)

    # Deterministic parameters for the two GCNConv heads
    key, k1, k2, k3, k4 = jax.random.split(key, 5)
    w_mu = glorot(k1, (in_channels, out_channels))
    b_mu = 0.05 * jax.random.normal(k3, (out_channels,), jnp.float32)
    w_ls = glorot(k2, (in_channels, out_channels))
    b_ls = 0.05 * jax.random.normal(k4, (out_channels,), jnp.float32)
    params = ((w_mu, b_mu), (w_ls, b_ls))

    mu, logstd = variational_linear_encoder_forward(
        params, x, edge_index, edge_weight=None)
    mu, logstd = jax.block_until_ready((mu, logstd))

    assert mu.shape == (num_nodes, out_channels)
    assert logstd.shape == (num_nodes, out_channels)
    assert mu.dtype == jnp.float32 and logstd.dtype == jnp.float32

    # ----- references -----
    adj1_p, dinv = _build_graph_operands(edge_index, None, num_nodes, num_nodes)
    adj1 = adj1_p.astype(jnp.float32)          # (A + I), exact for unit weights
    w_cat = jnp.concatenate([w_mu, w_ls], axis=1)

    # (a) matched-rounding reference: identical bf16 rounding of the MXU
    #     operands, f32 accumulation; only summation order differs.
    xw_b = ((x @ w_cat) * dinv[:, None]).astype(jnp.bfloat16).astype(jnp.float32)
    out_ref = (adj1 @ xw_b) * dinv[:, None]
    ref_mu = out_ref[:, :out_channels] + b_mu
    ref_ls = out_ref[:, out_channels:] + b_ls
    assert jnp.allclose(mu, ref_mu, rtol=1e-2, atol=1e-2)
    assert jnp.allclose(logstd, ref_ls, rtol=1e-2, atol=1e-2)

    # (b) full-f32 GCNConv reference (parity check, looser tolerance for the
    #     bf16 MXU operands).
    ahat = dinv[:, None] * adj1 * dinv[None, :]
    agg32 = ahat @ (x @ w_cat)
    assert jnp.allclose(mu, agg32[:, :out_channels] + b_mu, rtol=5e-2, atol=5e-2)
    assert jnp.allclose(logstd, agg32[:, out_channels:] + b_ls, rtol=5e-2, atol=5e-2)

    print("KERNEL_OK")
</pallas_src>

<mosaic_0001>
module attributes {stable_mosaic.version = 11 : i64} {
  func.func @kernel(%arg0: i32, %arg1: i32, %arg2: memref<128x128xbf16, #tpu.memory_space<vmem>>, %arg3: memref<128x128xbf16, #tpu.memory_space<vmem>>, %arg4: memref<128x128xf32, #tpu.memory_space<vmem>>) attributes {dimension_semantics = [#tpu.dimension_semantics<parallel>, #tpu.dimension_semantics<arbitrary>], iteration_bounds = array<i64: 1, 1>, scalar_prefetch = 0 : i64, scratch_operands = 0 : i64, tpu.core_type = #tpu.core_type<tc>, window_params = [{transform_indices = @transform_0, window_bounds = array<i64: 128, 128>}, {pipeline_mode = #tpu.pipeline_mode<synchronous>, transform_indices = @transform_1, window_bounds = array<i64: 128, 128>}, {transform_indices = @transform_2, window_bounds = array<i64: 128, 128>}]} {
    %c128_i32 = arith.constant 128 : i32
    %0 = arith.muli %arg1, %c128_i32 : i32
    %1 = tpu.assume_multiple %0, 128 : i32
    %2 = arith.index_cast %1 : i32 to index
    %c0 = arith.constant 0 : index
    %3 = vector.load %arg3[%2, %c0] : memref<128x128xbf16, #tpu.memory_space<vmem>>, vector<128x128xbf16>
    %c0_0 = arith.constant 0 : index
    %c0_1 = arith.constant 0 : index
    %4 = vector.load %arg2[%c0_0, %c0_1] : memref<128x128xbf16, #tpu.memory_space<vmem>>, vector<128x128xbf16>
    %cst = arith.constant dense<0.000000e+00> : vector<128x128xf32>
    %5 = tpu.matmul %4, %3, %cst {dimension_numbers = #tpu.dot_dimension_numbers<[1], [0], [0], [1], [0, 0, 1, 1], [], []>} : vector<128x128xbf16>, vector<128x128xbf16>, vector<128x128xf32> -> vector<128x128xf32>
    %c0_i32 = arith.constant 0 : i32
    %6 = arith.cmpi eq, %arg1, %c0_i32 : i32
    %7 = arith.extui %6 : i1 to i32
    %c0_i32_2 = arith.constant 0 : i32
    %8 = arith.cmpi ne, %7, %c0_i32_2 : i32
    scf.if %8 {
      %c0_5 = arith.constant 0 : index
      %c0_6 = arith.constant 0 : index
      %12 = vector.load %arg4[%c0_5, %c0_6] : memref<128x128xf32, #tpu.memory_space<vmem>>, vector<128x128xf32>
      tpu.vector_store %arg4[%c0_5, %c0_6], %5 {strides = array<i32>} : memref<128x128xf32, #tpu.memory_space<vmem>>, vector<128x128xf32>,
    } else {
    }
    %c0_i32_3 = arith.constant 0 : i32
    %9 = arith.cmpi ne, %arg1, %c0_i32_3 : i32
    %10 = arith.extui %9 : i1 to i32
    %c0_i32_4 = arith.constant 0 : i32
    %11 = arith.cmpi ne, %10, %c0_i32_4 : i32
    scf.if %11 {
      %c0_5 = arith.constant 0 : index
      %c0_6 = arith.constant 0 : index
      %12 = vector.load %arg4[%c0_5, %c0_6] : memref<128x128xf32, #tpu.memory_space<vmem>>, vector<128x128xf32>
      %13 = arith.addf %12, %5 : vector<128x128xf32>
      %c0_7 = arith.constant 0 : index
      %c0_8 = arith.constant 0 : index
      %14 = vector.load %arg4[%c0_7, %c0_8] : memref<128x128xf32, #tpu.memory_space<vmem>>, vector<128x128xf32>
      tpu.vector_store %arg4[%c0_7, %c0_8], %13 {strides = array<i32>} : memref<128x128xf32, #tpu.memory_space<vmem>>, vector<128x128xf32>,
    } else {
    }
    return
  }
  func.func @transform_0(%arg0: i32, %arg1: i32) -> (i32, i32) {
    %c0_i32 = arith.constant 0 : i32
    return %arg0, %arg1 : i32, i32
  }
  func.func @transform_1(%arg0: i32, %arg1: i32) -> (i32, i32) {
    %c0_i32 = arith.constant 0 : i32
    %c0_i32_0 = arith.constant 0 : i32
    %c0_i32_1 = arith.constant 0 : i32
    return %c0_i32, %c0_i32_0 : i32, i32
  }
  func.func @transform_2(%arg0: i32, %arg1: i32) -> (i32, i32) {
    %c0_i32 = arith.constant 0 : i32
    %c0_i32_0 = arith.constant 0 : i32
    return %arg0, %c0_i32 : i32, i32
  }
}

</mosaic_0001>

<llo_original>
// kernel: tpu_custom_call.1
$region0: #{tpu_custom_call.1}
  #allocation0 [shape = 'u32[]', space=smem, size = 0x4, offset = 0x4, fixed_abs, tag = 'smem constant byte address 0x4 - core index']
  #allocation1 [shape = 'u32[144,128]{1,0:T(1,128)}', space=vmem, size = 0x12000, scoped, tag = 'internal scratch']
  %s0 = inlined_call_operand.hbm [shape: bf16[128,128], index: 0, kind: input, shape index: {}]
  %s1 = inlined_call_operand.hbm [shape: bf16[128,128], index: 1, kind: input, shape index: {}]
  %s2 = inlined_call_operand.hbm [shape: f32[128,128], index: 2, kind: output, shape index: {}]
  %s3 = sld [smem:[#allocation0]]
  $region34: #{tpu_custom_call.1} parent=0
    _
  %s5 = ssub.s32 1, %s3
  %s6 = scalar_select 0, %s5, %s3
  $region1: #{tpu_custom_call.1} parent=0
    #allocation2 [shape = 'u8[32768]{0}', space=vmem, size = 0x8000, scoped, tag = 'input window, operand 0, single buffered']
    #allocation3 [shape = 's32[1]{0}', space=sflag, size = 0x4, scoped, tag = 'scoped memory for tpu_custom_call.1']
    #allocation4 [shape = 's32[1]{0}', space=sflag, size = 0x4, scoped, tag = 'scoped memory for tpu_custom_call.1']
    #allocation5 [shape = 'u8[32768]{0}', space=vmem, size = 0x8000, scoped, tag = 'input window, operand 1, single buffered']
    #allocation6 [shape = 's32[1]{0}', space=sflag, size = 0x4, scoped, tag = 'scoped memory for tpu_custom_call.1']
    #allocation7 [shape = 'u8[65536]{0}', space=vmem, size = 0x10000, scoped, tag = 'output window, operand 0, single buffered']
    %7 = vsyncpa [#allocation3], 0
    %8 = vsyncpa [#allocation6], 0
    %9 = vsyncpa [#allocation4], 0
    // Predicated region
    $region2: #{tpu_custom_call.1} parent=1 // pred_check
      _
    $region3: #{tpu_custom_call.1} parent=1 // pred_check_branch
      %11 = sbr.rel (0) target = $region5
    $region4: #{tpu_custom_call.1} parent=1 // pred_region
      %s13 = ssub.s32 1024, 1024
      %14 = vsyncadd [#allocation3], %s13
      %s15 = sshll.u32 [#allocation2], 4
      %s16 = int_to_ptr.vmem [resolvable:$true] %s15
      %21 = dma.hbm_to_vmem [thread:$0]  %s0, 1024, %s16, [#allocation3], 64, 64, 4
    $region5: #{tpu_custom_call.1} parent=1 // pred_fallthru
      _
    // Predicated region
    $region6: #{tpu_custom_call.1} parent=1 // pred_check
      _
    $region7: #{tpu_custom_call.1} parent=1 // pred_check_branch
      %23 = sbr.rel (0) target = $region9
    $region8: #{tpu_custom_call.1} parent=1 // pred_region
      %s25 = ssub.s32 1024, 1024
      %26 = vsyncadd [#allocation6], %s25
      %s27 = sshll.u32 [#allocation5], 4
      %s28 = int_to_ptr.vmem [resolvable:$true] %s27
      %33 = dma.hbm_to_vmem [thread:$0]  %s1, 1024, %s28, [#allocation6], 64, 64, 4
    $region9: #{tpu_custom_call.1} parent=1 // pred_fallthru
      _
    // Predicated region
    $region10: #{tpu_custom_call.1} parent=1 // pred_check
      _
    $region11: #{tpu_custom_call.1} parent=1 // pred_check_branch
      %35 = sbr.rel (0) target = $region13
    $region12: #{tpu_custom_call.1} parent=1 // pred_region
      %36 = dma.done [#allocation3], 1024
    $region13: #{tpu_custom_call.1} parent=1 // pred_fallthru
      _
    // Predicated region
    $region14: #{tpu_custom_call.1} parent=1 // pred_check
      _
    $region15: #{tpu_custom_call.1} parent=1 // pred_check_branch
      %38 = sbr.rel (0) target = $region17
    $region16: #{tpu_custom_call.1} parent=1 // pred_region
      %39 = dma.done [#allocation6], 1024
    $region17: #{tpu_custom_call.1} parent=1 // pred_fallthru
      _
    %s41 = smul.u32 0, 128
    %s42 = sshra.s32 %s41, 3
    %s43 = sand.u32 %s41, 7
    %s44 = smul.addr %s42, 4
    %s45 = scalar_lea.vmem [#allocation5], %s44
    %v46 = vld [vmem:[%s45] sm:$0xf]
    %v47 = vld [vmem:[%s45 + $0x4] sm:$0xf]
    %v48 = vld [vmem:[%s45 + $0x8] sm:$0xf]
    %v49 = vld [vmem:[%s45 + $0xc] sm:$0xf]
    %v50 = vld [vmem:[%s45 + $0x10] sm:$0xf]
    %v51 = vld [vmem:[%s45 + $0x14] sm:$0xf]
    %v52 = vld [vmem:[%s45 + $0x18] sm:$0xf]
    %v53 = vld [vmem:[%s45 + $0x1c] sm:$0xf]
    %v54 = vld [vmem:[%s45 + $0x20] sm:$0xf]
    %v55 = vld [vmem:[%s45 + $0x24] sm:$0xf]
    %v56 = vld [vmem:[%s45 + $0x28] sm:$0xf]
    %v57 = vld [vmem:[%s45 + $0x2c] sm:$0xf]
    %v58 = vld [vmem:[%s45 + $0x30] sm:$0xf]
    %v59 = vld [vmem:[%s45 + $0x34] sm:$0xf]
    %v60 = vld [vmem:[%s45 + $0x38] sm:$0xf]
    %v61 = vld [vmem:[%s45 + $0x3c] sm:$0xf]
    %v62 = vld [vmem:[#allocation2] sm:$0xf]
    %v63 = vld [vmem:[#allocation2 + $0x4] sm:$0xf]
    %v64 = vld [vmem:[#allocation2 + $0x8] sm:$0xf]
    %v65 = vld [vmem:[#allocation2 + $0xc] sm:$0xf]
    %v66 = vld [vmem:[#allocation2 + $0x10] sm:$0xf]
    %v67 = vld [vmem:[#allocation2 + $0x14] sm:$0xf]
    %v68 = vld [vmem:[#allocation2 + $0x18] sm:$0xf]
    %v69 = vld [vmem:[#allocation2 + $0x1c] sm:$0xf]
    %v70 = vld [vmem:[#allocation2 + $0x20] sm:$0xf]
    %v71 = vld [vmem:[#allocation2 + $0x24] sm:$0xf]
    %v72 = vld [vmem:[#allocation2 + $0x28] sm:$0xf]
    %v73 = vld [vmem:[#allocation2 + $0x2c] sm:$0xf]
    %v74 = vld [vmem:[#allocation2 + $0x30] sm:$0xf]
    %v75 = vld [vmem:[#allocation2 + $0x34] sm:$0xf]
    %v76 = vld [vmem:[#allocation2 + $0x38] sm:$0xf]
    %v77 = vld [vmem:[#allocation2 + $0x3c] sm:$0xf]
    %v94 = vunpack.c.l.b16 %v62
    %v95 = vunpack.c.l.b16 %v63
    %v96 = vunpack.c.l.b16 %v64
    %v97 = vunpack.c.l.b16 %v65
    %v98 = vunpack.c.l.b16 %v66
    %v99 = vunpack.c.l.b16 %v67
    %v100 = vunpack.c.l.b16 %v68
    %v101 = vunpack.c.l.b16 %v69
    %v102 = vunpack.c.l.b16 %v70
    %v103 = vunpack.c.l.b16 %v71
    %v104 = vunpack.c.l.b16 %v72
    %v105 = vunpack.c.l.b16 %v73
    %v106 = vunpack.c.l.b16 %v74
    %v107 = vunpack.c.l.b16 %v75
    %v108 = vunpack.c.l.b16 %v76
    %v109 = vunpack.c.l.b16 %v77
    %v110 = vpack.c.b16 %v95, %v94
    %v111 = vpack.c.b16 %v97, %v96
    %v112 = vpack.c.b16 %v99, %v98
    %v113 = vpack.c.b16 %v101, %v100
    %v114 = vpack.c.b16 %v103, %v102
    %v115 = vpack.c.b16 %v105, %v104
    %v116 = vpack.c.b16 %v107, %v106
    %v117 = vpack.c.b16 %v109, %v108
    %v142 = vunpack.c.l.b16 %v46
    %v143 = vunpack.c.l.b16 %v47
    %v144 = vunpack.c.l.b16 %v48
    %v145 = vunpack.c.l.b16 %v49
    %v146 = vunpack.c.l.b16 %v50
    %v147 = vunpack.c.l.b16 %v51
    %v148 = vunpack.c.l.b16 %v52
    %v149 = vunpack.c.l.b16 %v53
    %v150 = vunpack.c.l.b16 %v54
    %v151 = vunpack.c.l.b16 %v55
    %v152 = vunpack.c.l.b16 %v56
    %v153 = vunpack.c.l.b16 %v57
    %v154 = vunpack.c.l.b16 %v58
    %v155 = vunpack.c.l.b16 %v59
    %v156 = vunpack.c.l.b16 %v60
    %v157 = vunpack.c.l.b16 %v61
    %v158 = vpack.c.b16 %v143, %v142
    %v159 = vpack.c.b16 %v145, %v144
    %v160 = vpack.c.b16 %v147, %v146
    %v161 = vpack.c.b16 %v149, %v148
    %v162 = vpack.c.b16 %v151, %v150
    %v163 = vpack.c.b16 %v153, %v152
    %v164 = vpack.c.b16 %v155, %v154
    %v165 = vpack.c.b16 %v157, %v156
    %174 = vmatprep.subr.bf16.mxu0 0
    %175 = vmatpush1.bf16.msra.mxu0 %v158
    %176 = vmatprep.subr.bf16.mxu0 0
    %177 = vmatpush1.bf16.msra.mxu0 %v159
    %178 = vmatprep.subr.bf16.mxu0 0
    %179 = vmatpush1.bf16.msra.mxu0 %v160
    %180 = vmatprep.subr.bf16.mxu0 0
    %181 = vmatpush1.bf16.msra.mxu0 %v161
    %182 = vmatprep.subr.bf16.mxu0 0
    %183 = vmatpush1.bf16.msra.mxu0 %v162
    %184 = vmatprep.subr.bf16.mxu0 0
    %185 = vmatpush1.bf16.msra.mxu0 %v163
    %186 = vmatprep.subr.bf16.mxu0 0
    %187 = vmatpush1.bf16.msra.mxu0 %v164
    %188 = vmatprep.subr.bf16.mxu0 0
    %189 = vmatpush1.bf16.msra.mxu0 %v165
    %190 = vmatprep.subr.bf16.mxu0 0
    %191 = vmatpush1.bf16.msra.mxu0 0
    %192 = vmatprep.subr.bf16.mxu0 0
    %193 = vmatpush1.bf16.msra.mxu0 0
    %194 = vmatprep.subr.bf16.mxu0 0
    %195 = vmatpush1.bf16.msra.mxu0 0
    %196 = vmatprep.subr.bf16.mxu0 0
    %197 = vmatpush1.bf16.msra.mxu0 0
    %198 = vmatprep.subr.bf16.mxu0 0
    %199 = vmatpush1.bf16.msra.mxu0 0
    %200 = vmatprep.subr.bf16.mxu0 0
    %201 = vmatpush1.bf16.msra.mxu0 0
    %202 = vmatprep.subr.bf16.mxu0 0
    %203 = vmatpush1.bf16.msra.mxu0 0
    %204 = vmatprep.subr.bf16.mxu0 0
    %205 = vmatpush1.bf16.msra.mxu0 0
    %206 = vmatprep.mubr.bf16.mxu0 0
    %207 = vmatmul.mubr.bf16.gmra.mrb[0].mxu0 %v110
    %v208 = vpop.f32.mrb[0].mxu0
    %v209 = vadd.f32 0.0, %v208
    %v210 = vpop.f32.mrb[0].mxu0
    %v211 = vpop.f32.mrb[0].mxu0
    %v212 = vadd.f32 0.0, %v211
    %v213 = vpop.f32.mrb[0].mxu0
    %214 = vmatprep.mubr.bf16.mxu0 0
    %215 = vmatmul.mubr.bf16.gmra.mrb[0].mxu0 %v111
    %v216 = vpop.f32.mrb[0].mxu0
    %v217 = vadd.f32 0.0, %v216
    %v218 = vpop.f32.mrb[0].mxu0
    %v219 = vpop.f32.mrb[0].mxu0
    %v220 = vadd.f32 0.0, %v219
    %v221 = vpop.f32.mrb[0].mxu0
    %222 = vmatprep.mubr.bf16.mxu0 0
    %223 = vmatmul.mubr.bf16.gmra.mrb[0].mxu0 %v112
    %v224 = vpop.f32.mrb[0].mxu0
    %v225 = vadd.f32 0.0, %v224
    %v226 = vpop.f32.mrb[0].mxu0
    %v227 = vpop.f32.mrb[0].mxu0
    %v228 = vadd.f32 0.0, %v227
    %v229 = vpop.f32.mrb[0].mxu0
    %230 = vmatprep.mubr.bf16.mxu0 0
    %231 = vmatmul.mubr.bf16.gmra.mrb[0].mxu0 %v113
    %v232 = vpop.f32.mrb[0].mxu0
    %v233 = vadd.f32 0.0, %v232
    %v234 = vpop.f32.mrb[0].mxu0
    %v235 = vpop.f32.mrb[0].mxu0
    %v236 = vadd.f32 0.0, %v235
    %v237 = vpop.f32.mrb[0].mxu0
    %238 = vmatprep.mubr.bf16.mxu0 0
    %239 = vmatmul.mubr.bf16.gmra.mrb[0].mxu0 %v114
    %v240 = vpop.f32.mrb[0].mxu0
    %v241 = vadd.f32 0.0, %v240
    %v242 = vpop.f32.mrb[0].mxu0
    %v243 = vpop.f32.mrb[0].mxu0
    %v244 = vadd.f32 0.0, %v243
    %v245 = vpop.f32.mrb[0].mxu0
    %246 = vmatprep.mubr.bf16.mxu0 0
    %247 = vmatmul.mubr.bf16.gmra.mrb[0].mxu0 %v115
    %v248 = vpop.f32.mrb[0].mxu0
    %v249 = vadd.f32 0.0, %v248
    %v250 = vpop.f32.mrb[0].mxu0
    %v251 = vpop.f32.mrb[0].mxu0
    %v252 = vadd.f32 0.0, %v251
    %v253 = vpop.f32.mrb[0].mxu0
    %254 = vmatprep.mubr.bf16.mxu0 0
    %255 = vmatmul.mubr.bf16.gmra.mrb[0].mxu0 %v116
    %v256 = vpop.f32.mrb[0].mxu0
    %v257 = vadd.f32 0.0, %v256
    %v258 = vpop.f32.mrb[0].mxu0
    %v259 = vpop.f32.mrb[0].mxu0
    %v260 = vadd.f32 0.0, %v259
    %v261 = vpop.f32.mrb[0].mxu0
    %262 = vmatprep.mubr.bf16.mxu0 0
    %263 = vmatmul.mubr.bf16.gmra.mrb[0].mxu0 %v117
    %v264 = vpop.f32.mrb[0].mxu0
    %v265 = vadd.f32 0.0, %v264
    %v266 = vpop.f32.mrb[0].mxu0
    %v267 = vpop.f32.mrb[0].mxu0
    %v268 = vadd.f32 0.0, %v267
    %v269 = vpop.f32.mrb[0].mxu0
    %270 = vdwg.mxu0
    %p271 = scmp.eq.s32.totalorder 0, 0
    // Predicated region
    $region18: #{tpu_custom_call.1} parent=1 // pred_check
      %p272 = pneg %p271
    $region19: #{tpu_custom_call.1} parent=1 // pred_check_branch
      %274 = sbr.rel (%p272) target = $region21
    $region20: #{tpu_custom_call.1} parent=1 // pred_region
      %275 = vst [vmem:[#allocation7] sm:$0xff] %v209
      %276 = vst [vmem:[#allocation7 + $0x8] sm:$0xff] %v212
      %277 = vst [vmem:[#allocation7 + $0x10] sm:$0xff] %v217
      %278 = vst [vmem:[#allocation7 + $0x18] sm:$0xff] %v220
      %279 = vst [vmem:[#allocation7 + $0x20] sm:$0xff] %v225
      %280 = vst [vmem:[#allocation7 + $0x28] sm:$0xff] %v228
      %281 = vst [vmem:[#allocation7 + $0x30] sm:$0xff] %v233
      %282 = vst [vmem:[#allocation7 + $0x38] sm:$0xff] %v236
      %283 = vst [vmem:[#allocation7 + $0x40] sm:$0xff] %v241
      %284 = vst [vmem:[#allocation7 + $0x48] sm:$0xff] %v244
      %285 = vst [vmem:[#allocation7 + $0x50] sm:$0xff] %v249
      %286 = vst [vmem:[#allocation7 + $0x58] sm:$0xff] %v252
      %287 = vst [vmem:[#allocation7 + $0x60] sm:$0xff] %v257
      %288 = vst [vmem:[#allocation7 + $0x68] sm:$0xff] %v260
      %289 = vst [vmem:[#allocation7 + $0x70] sm:$0xff] %v265
      %290 = vst [vmem:[#allocation7 + $0x78] sm:$0xff] %v268
    $region21: #{tpu_custom_call.1} parent=1 // pred_fallthru
      _
    %p291 = scmp.ne.s32.totalorder 0, 0
    // Predicated region
    $region22: #{tpu_custom_call.1} parent=1 // pred_check
      %p292 = pneg %p291
    $region23: #{tpu_custom_call.1} parent=1 // pred_check_branch
      %294 = sbr.rel (%p292) target = $region25
    $region24: #{tpu_custom_call.1} parent=1 // pred_region
      %v295 = vld [vmem:[#allocation7] sm:$0xff]
      %v296 = vld [vmem:[#allocation7 + $0x8] sm:$0xff]
      %v297 = vld [vmem:[#allocation7 + $0x10] sm:$0xff]
      %v298 = vld [vmem:[#allocation7 + $0x18] sm:$0xff]
      %v299 = vld [vmem:[#allocation7 + $0x20] sm:$0xff]
      %v300 = vld [vmem:[#allocation7 + $0x28] sm:$0xff]
      %v301 = vld [vmem:[#allocation7 + $0x30] sm:$0xff]
      %v302 = vld [vmem:[#allocation7 + $0x38] sm:$0xff]
      %v303 = vld [vmem:[#allocation7 + $0x40] sm:$0xff]
      %v304 = vld [vmem:[#allocation7 + $0x48] sm:$0xff]
      %v305 = vld [vmem:[#allocation7 + $0x50] sm:$0xff]
      %v306 = vld [vmem:[#allocation7 + $0x58] sm:$0xff]
      %v307 = vld [vmem:[#allocation7 + $0x60] sm:$0xff]
      %v308 = vld [vmem:[#allocation7 + $0x68] sm:$0xff]
      %v309 = vld [vmem:[#allocation7 + $0x70] sm:$0xff]
      %v310 = vld [vmem:[#allocation7 + $0x78] sm:$0xff]
      %v311 = vadd.f32 %v295, %v209
      %v312 = vadd.f32 %v296, %v212
      %v313 = vadd.f32 %v297, %v217
      %v314 = vadd.f32 %v298, %v220
      %v315 = vadd.f32 %v299, %v225
      %v316 = vadd.f32 %v300, %v228
      %v317 = vadd.f32 %v301, %v233
      %v318 = vadd.f32 %v302, %v236
      %v319 = vadd.f32 %v303, %v241
      %v320 = vadd.f32 %v304, %v244
      %v321 = vadd.f32 %v305, %v249
      %v322 = vadd.f32 %v306, %v252
      %v323 = vadd.f32 %v307, %v257
      %v324 = vadd.f32 %v308, %v260
      %v325 = vadd.f32 %v309, %v265
      %v326 = vadd.f32 %v310, %v268
      %327 = vst [vmem:[#allocation7] sm:$0xff] %v311
      %328 = vst [vmem:[#allocation7 + $0x8] sm:$0xff] %v312
      %329 = vst [vmem:[#allocation7 + $0x10] sm:$0xff] %v313
      %330 = vst [vmem:[#allocation7 + $0x18] sm:$0xff] %v314
      %331 = vst [vmem:[#allocation7 + $0x20] sm:$0xff] %v315
      %332 = vst [vmem:[#allocation7 + $0x28] sm:$0xff] %v316
      %333 = vst [vmem:[#allocation7 + $0x30] sm:$0xff] %v317
      %334 = vst [vmem:[#allocation7 + $0x38] sm:$0xff] %v318
      %335 = vst [vmem:[#allocation7 + $0x40] sm:$0xff] %v319
      %336 = vst [vmem:[#allocation7 + $0x48] sm:$0xff] %v320
      %337 = vst [vmem:[#allocation7 + $0x50] sm:$0xff] %v321
      %338 = vst [vmem:[#allocation7 + $0x58] sm:$0xff] %v322
      %339 = vst [vmem:[#allocation7 + $0x60] sm:$0xff] %v323
      %340 = vst [vmem:[#allocation7 + $0x68] sm:$0xff] %v324
      %341 = vst [vmem:[#allocation7 + $0x70] sm:$0xff] %v325
      %342 = vst [vmem:[#allocation7 + $0x78] sm:$0xff] %v326
    $region25: #{tpu_custom_call.1} parent=1 // pred_fallthru
      _
    // Predicated region
    $region26: #{tpu_custom_call.1} parent=1 // pred_check
      _
    $region27: #{tpu_custom_call.1} parent=1 // pred_check_branch
      %344 = sbr.rel (0) target = $region29
    $region28: #{tpu_custom_call.1} parent=1 // pred_region
      %s346 = ssub.s32 2048, 2048
      %347 = vsyncadd [#allocation4], %s346
      %s348 = sshll.u32 [#allocation7], 4
      %s349 = int_to_ptr.vmem [resolvable:$true] %s348
      %354 = dma.vmem_to_hbm [thread:$0]  %s349, 2048, %s2, [#allocation4], 128, 128, 8
    $region29: #{tpu_custom_call.1} parent=1 // pred_fallthru
      _
    // Predicated region
    $region30: #{tpu_custom_call.1} parent=1 // pred_check
      _
    $region31: #{tpu_custom_call.1} parent=1 // pred_check_branch
      %356 = sbr.rel (0) target = $region33
    $region32: #{tpu_custom_call.1} parent=1 // pred_region
      %357 = dma.done [#allocation4], 2048
    $region33: #{tpu_custom_call.1} parent=1 // pred_fallthru
      _
    %358 = vsyncpa [#allocation3], 1
    %359 = vsyncpa [#allocation6], 1
    %360 = vsyncpa [#allocation4], 1

</llo_original>
